<compile_context>
chip_gen: v7x
topology: tpu7x:2x2x1
jax: 0.10.0
libtpu: 0.0.40
codegen_flags: <defaults>
</compile_context>

<pallas_src>
import functools

import jax
import jax.numpy as jnp
from jax.experimental import pallas as pl
from jax.experimental.pallas import tpu as pltpu


def _round_up(n: int, m: int) -> int:
    return pl.cdiv(n, m) * m


def _sigmoid(x):
    # sigmoid(x) = 0.5 * (1 + tanh(x/2)): single EUP transcendental per element
    # (vs. exp + reciprocal = 2 EUP ops), VALU does the cheap scale/shift.
    return 0.5 * (jnp.tanh(0.5 * x) + 1.0)


def mlp_kernel(x_ref, w1_ref, b1_ref, w2_ref, b2_ref, w3_ref, b3_ref, out_ref,
               *, n_classes: int):
    x = x_ref[...]                                     # (TM, F) f32
    n_features = x.shape[1]

    # ---- layer 1 (+ sigmoid): tiny K -> VPU broadcast-FMA path, skip the MXU.
    h1 = x[:, 0:1] * w1_ref[0:1, :]                    # (TM, H_PAD) f32
    for f in range(1, n_features):                     # static unroll (F is tiny)
        h1 = h1 + x[:, f:f + 1] * w1_ref[f:f + 1, :]
    h1 = _sigmoid(h1 + b1_ref[...])

    # ---- layer 2 (+ sigmoid): bf16 operands on the MXU, f32 accumulation, f32 elementwise.
    h2 = jnp.dot(h1.astype(jnp.bfloat16), w2_ref[...],
                 preferred_element_type=jnp.float32) + b2_ref[...]
    h2 = _sigmoid(h2)

    # ---- layer 3 (logits).
    logits = jnp.dot(h2.astype(jnp.bfloat16), w3_ref[...],
                     preferred_element_type=jnp.float32) + b3_ref[...]

    # ---- log_softmax over classes; mask padded class lanes before the reductions.
    lane = jax.lax.broadcasted_iota(jnp.int32, logits.shape, 1)
    logits = jnp.where(lane < n_classes, logits, -1e30)
    m = jnp.max(logits, axis=1, keepdims=True)         # XLU cross-lane reduce
    shifted = logits - m
    lse = jnp.log(jnp.sum(jnp.exp(shifted), axis=1, keepdims=True))
    out_ref[...] = shifted - lse


def _pad2d(a, rows, cols, dtype):
    a = a.reshape(a.shape[0] if a.ndim == 2 else 1, -1)
    r, c = a.shape
    return jnp.pad(a, ((0, rows - r), (0, cols - c))).astype(dtype)


def pytorch_classifier_forward(x, w1, b1, w2, b2, w3, b3, *, block_m: int = 512):
    """x: (B, n_features) f32. Weights stored transposed vs. PyTorch: (in, out)."""
    B, F = x.shape
    H = w1.shape[1]
    C = w3.shape[1]

    H_PAD = _round_up(H, 128)                     # lane-dense hidden width
    C_PAD = _round_up(C, 128)                     # lane-dense output width -> unmasked stores

    # Balanced batch tiling: split B as evenly as possible across ceil(B/block_m) blocks,
    # sublane (8) aligned, so the last block does almost no padded-row work.
    num_blocks = pl.cdiv(B, block_m)
    TM = _round_up(pl.cdiv(B, num_blocks), 8)
    B_PAD = num_blocks * TM

    xp = _pad2d(x, B_PAD, F, jnp.float32)
    # Zero padding keeps the math exact: padded w2/w3 *rows* are zero, so the
    # sigmoid(0)=0.5 values living in padded hidden lanes never reach a real lane.
    w1p = _pad2d(w1, F, H_PAD, jnp.float32)       # VPU path -> stays f32
    b1p = _pad2d(b1, 1, H_PAD, jnp.float32)
    w2p = _pad2d(w2, H_PAD, H_PAD, jnp.bfloat16)  # MXU operands in bf16
    b2p = _pad2d(b2, 1, H_PAD, jnp.float32)
    w3p = _pad2d(w3, H_PAD, C_PAD, jnp.bfloat16)
    b3p = _pad2d(b3, 1, C_PAD, jnp.float32)

    kernel = functools.partial(mlp_kernel, n_classes=C)

    out = pl.pallas_call(
        kernel,
        out_shape=jax.ShapeDtypeStruct((B_PAD, C_PAD), jnp.float32),
        grid=(B_PAD // TM,),
        in_specs=[
            pl.BlockSpec((TM, F), lambda i: (i, 0)),        # x: tiled over batch
            pl.BlockSpec((F, H_PAD), lambda i: (0, 0)),     # weights: VMEM-resident
            pl.BlockSpec((1, H_PAD), lambda i: (0, 0)),
            pl.BlockSpec((H_PAD, H_PAD), lambda i: (0, 0)),
            pl.BlockSpec((1, H_PAD), lambda i: (0, 0)),
            pl.BlockSpec((H_PAD, C_PAD), lambda i: (0, 0)),
            pl.BlockSpec((1, C_PAD), lambda i: (0, 0)),
        ],
        out_specs=pl.BlockSpec((TM, C_PAD), lambda i: (i, 0)),   # lane-dense output
        compiler_params=pltpu.CompilerParams(
            dimension_semantics=("parallel",),     # batch axis -> both TCs on v7x
            vmem_limit_bytes=32 * 1024 * 1024,     # tiny footprint, < v7x's 64 MiB
        ),
    )(xp, w1p, b1p, w2p, b2p, w3p, b3p)

    return out[:B, :C]


def init_params(key, n_features=2, n_classes=5, n_neurons=60):
    """Deterministic synthetic init (PyTorch Linear shapes, stored transposed)."""
    ks = jax.random.split(key, 6)
    w1 = jax.random.normal(ks[0], (n_features, n_neurons), jnp.float32) * 0.5
    b1 = jax.random.normal(ks[1], (1, n_neurons), jnp.float32) * 0.1
    w2 = jax.random.normal(ks[2], (n_neurons, n_neurons), jnp.float32) * 0.2
    b2 = jax.random.normal(ks[3], (1, n_neurons), jnp.float32) * 0.1
    w3 = jax.random.normal(ks[4], (n_neurons, n_classes), jnp.float32) * 0.2
    b3 = jax.random.normal(ks[5], (1, n_classes), jnp.float32) * 0.1
    return w1, b1, w2, b2, w3, b3


def reference_forward(x, w1, b1, w2, b2, w3, b3):
    h1 = jax.nn.sigmoid(x @ w1 + b1)
    h2 = jax.nn.sigmoid(h1 @ w2 + b2)
    logits = h2 @ w3 + b3
    return jax.nn.log_softmax(logits, axis=1)


if __name__ == "__main__":
    key = jax.random.PRNGKey(0)
    kx, kp = jax.random.split(key)

    B, n_features, n_classes, n_neurons = 8, 2, 5, 60
    params = init_params(kp, n_features, n_classes, n_neurons)

    # Small single-block case (matches the module's natural demo size).
    x = jax.random.normal(kx, (B, n_features), jnp.float32)
    out = jax.block_until_ready(pytorch_classifier_forward(x, *params))
    ref = reference_forward(x, *params)
    assert out.shape == (B, n_classes)
    # bf16 MXU operands -> compare to f32 reference at bf16-level tolerance.
    assert jnp.allclose(out, ref, atol=5e-2, rtol=5e-2), "mismatch vs JAX reference (small B)"

    # Multi-block case: exercises the batch grid (2 balanced blocks, B padded to 608).
    B2 = 600
    x2 = jax.random.normal(jax.random.fold_in(kx, 1), (B2, n_features), jnp.float32)
    out2 = jax.block_until_ready(pytorch_classifier_forward(x2, *params))
    ref2 = reference_forward(x2, *params)
    assert out2.shape == (B2, n_classes)
    assert jnp.allclose(out2, ref2, atol=5e-2, rtol=5e-2), "mismatch vs JAX reference (gridded B)"

    print("KERNEL_OK")
</pallas_src>

<mosaic_0001>
module attributes {stable_mosaic.version = 11 : i64} {
  func.func @mlp_kernel(%arg0: i32, %arg1: memref<8x2xf32, #tpu.memory_space<vmem>>, %arg2: memref<2x128xf32, #tpu.memory_space<vmem>>, %arg3: memref<1x128xf32, #tpu.memory_space<vmem>>, %arg4: memref<128x128xbf16, #tpu.memory_space<vmem>>, %arg5: memref<1x128xf32, #tpu.memory_space<vmem>>, %arg6: memref<128x128xbf16, #tpu.memory_space<vmem>>, %arg7: memref<1x128xf32, #tpu.memory_space<vmem>>, %arg8: memref<8x128xf32, #tpu.memory_space<vmem>>) attributes {dimension_semantics = [#tpu.dimension_semantics<parallel>], iteration_bounds = array<i64: 1>, scalar_prefetch = 0 : i64, scratch_operands = 0 : i64, tpu.core_type = #tpu.core_type<tc>, window_params = [{transform_indices = @transform_0, window_bounds = array<i64: 8, 2>}, {pipeline_mode = #tpu.pipeline_mode<synchronous>, transform_indices = @transform_1, window_bounds = array<i64: 2, 128>}, {pipeline_mode = #tpu.pipeline_mode<synchronous>, transform_indices = @transform_2, window_bounds = array<i64: 1, 128>}, {pipeline_mode = #tpu.pipeline_mode<synchronous>, transform_indices = @transform_3, window_bounds = array<i64: 128, 128>}, {pipeline_mode = #tpu.pipeline_mode<synchronous>, transform_indices = @transform_4, window_bounds = array<i64: 1, 128>}, {pipeline_mode = #tpu.pipeline_mode<synchronous>, transform_indices = @transform_5, window_bounds = array<i64: 128, 128>}, {pipeline_mode = #tpu.pipeline_mode<synchronous>, transform_indices = @transform_6, window_bounds = array<i64: 1, 128>}, {transform_indices = @transform_7, window_bounds = array<i64: 8, 128>}]} {
    %c0 = arith.constant 0 : index
    %c0_0 = arith.constant 0 : index
    %0 = vector.load %arg1[%c0, %c0_0] : memref<8x2xf32, #tpu.memory_space<vmem>>, vector<8x2xf32>
    %1 = vector.extract_strided_slice %0 {offsets = [0, 0], sizes = [8, 1], strides = [1, 1]} : vector<8x2xf32> to vector<8x1xf32>
    %c0_1 = arith.constant 0 : index
    %c0_2 = arith.constant 0 : index
    %2 = vector.load %arg2[%c0_1, %c0_2] : memref<2x128xf32, #tpu.memory_space<vmem>>, vector<1x128xf32>
    %3 = vector.broadcast %1 : vector<8x1xf32> to vector<8x128xf32>
    %4 = vector.broadcast %2 : vector<1x128xf32> to vector<8x128xf32>
    %5 = arith.mulf %3, %4 : vector<8x128xf32>
    %6 = vector.extract_strided_slice %0 {offsets = [0, 1], sizes = [8, 1], strides = [1, 1]} : vector<8x2xf32> to vector<8x1xf32>
    %c1 = arith.constant 1 : index
    %c0_3 = arith.constant 0 : index
    %7 = vector.load %arg2[%c1, %c0_3] : memref<2x128xf32, #tpu.memory_space<vmem>>, vector<1x128xf32>
    %8 = vector.broadcast %6 : vector<8x1xf32> to vector<8x128xf32>
    %9 = vector.broadcast %7 : vector<1x128xf32> to vector<8x128xf32>
    %10 = arith.mulf %8, %9 : vector<8x128xf32>
    %11 = arith.addf %5, %10 : vector<8x128xf32>
    %c0_4 = arith.constant 0 : index
    %c0_5 = arith.constant 0 : index
    %12 = vector.load %arg3[%c0_4, %c0_5] : memref<1x128xf32, #tpu.memory_space<vmem>>, vector<1x128xf32>
    %13 = vector.broadcast %12 : vector<1x128xf32> to vector<8x128xf32>
    %14 = arith.addf %11, %13 : vector<8x128xf32>
    %cst = arith.constant 5.000000e-01 : f32
    %15 = vector.broadcast %cst : f32 to vector<8x128xf32>
    %16 = arith.mulf %15, %14 : vector<8x128xf32>
    %17 = math.tanh %16 : vector<8x128xf32>
    %cst_6 = arith.constant 1.000000e+00 : f32
    %18 = vector.broadcast %cst_6 : f32 to vector<8x128xf32>
    %19 = arith.addf %17, %18 : vector<8x128xf32>
    %cst_7 = arith.constant 5.000000e-01 : f32
    %20 = vector.broadcast %cst_7 : f32 to vector<8x128xf32>
    %21 = arith.mulf %20, %19 : vector<8x128xf32>
    %22 = arith.truncf %21 : vector<8x128xf32> to vector<8x128xbf16>
    %c0_8 = arith.constant 0 : index
    %c0_9 = arith.constant 0 : index
    %23 = vector.load %arg4[%c0_8, %c0_9] : memref<128x128xbf16, #tpu.memory_space<vmem>>, vector<128x128xbf16>
    %cst_10 = arith.constant dense<0.000000e+00> : vector<8x128xf32>
    %24 = tpu.matmul %22, %23, %cst_10 {dimension_numbers = #tpu.dot_dimension_numbers<[1], [0], [0], [1], [0, 0, 1, 1], [], []>} : vector<8x128xbf16>, vector<128x128xbf16>, vector<8x128xf32> -> vector<8x128xf32>
    %c0_11 = arith.constant 0 : index
    %c0_12 = arith.constant 0 : index
    %25 = vector.load %arg5[%c0_11, %c0_12] : memref<1x128xf32, #tpu.memory_space<vmem>>, vector<1x128xf32>
    %26 = vector.broadcast %25 : vector<1x128xf32> to vector<8x128xf32>
    %27 = arith.addf %24, %26 : vector<8x128xf32>
    %cst_13 = arith.constant 5.000000e-01 : f32
    %28 = vector.broadcast %cst_13 : f32 to vector<8x128xf32>
    %29 = arith.mulf %28, %27 : vector<8x128xf32>
    %30 = math.tanh %29 : vector<8x128xf32>
    %cst_14 = arith.constant 1.000000e+00 : f32
    %31 = vector.broadcast %cst_14 : f32 to vector<8x128xf32>
    %32 = arith.addf %30, %31 : vector<8x128xf32>
    %cst_15 = arith.constant 5.000000e-01 : f32
    %33 = vector.broadcast %cst_15 : f32 to vector<8x128xf32>
    %34 = arith.mulf %33, %32 : vector<8x128xf32>
    %35 = arith.truncf %34 : vector<8x128xf32> to vector<8x128xbf16>
    %c0_16 = arith.constant 0 : index
    %c0_17 = arith.constant 0 : index
    %36 = vector.load %arg6[%c0_16, %c0_17] : memref<128x128xbf16, #tpu.memory_space<vmem>>, vector<128x128xbf16>
    %cst_18 = arith.constant dense<0.000000e+00> : vector<8x128xf32>
    %37 = tpu.matmul %35, %36, %cst_18 {dimension_numbers = #tpu.dot_dimension_numbers<[1], [0], [0], [1], [0, 0, 1, 1], [], []>} : vector<8x128xbf16>, vector<128x128xbf16>, vector<8x128xf32> -> vector<8x128xf32>
    %c0_19 = arith.constant 0 : index
    %c0_20 = arith.constant 0 : index
    %38 = vector.load %arg7[%c0_19, %c0_20] : memref<1x128xf32, #tpu.memory_space<vmem>>, vector<1x128xf32>
    %39 = vector.broadcast %38 : vector<1x128xf32> to vector<8x128xf32>
    %40 = arith.addf %37, %39 : vector<8x128xf32>
    %41 = tpu.iota {dimensions = array<i32: 1>} : vector<8x128xi32>
    %c5_i32 = arith.constant 5 : i32
    %42 = vector.broadcast %c5_i32 : i32 to vector<8x128xi32>
    %43 = arith.cmpi slt, %41, %42 : vector<8x128xi32>
    %cst_21 = arith.constant -1.000000e+30 : f32
    %44 = vector.broadcast %cst_21 : f32 to vector<8x128xf32>
    %45 = arith.select %43, %40, %44 : vector<8x128xi1>, vector<8x128xf32>
    %cst_22 = arith.constant dense<0xFF800000> : vector<8xf32>
    %46 = vector.multi_reduction <maximumf>, %45, %cst_22 [1] : vector<8x128xf32> to vector<8xf32>
    %47 = vector.shape_cast %46 : vector<8xf32> to vector<8x1xf32>
    %48 = vector.broadcast %47 : vector<8x1xf32> to vector<8x128xf32>
    %49 = arith.subf %45, %48 : vector<8x128xf32>
    %50 = math.exp %49 : vector<8x128xf32>
    %cst_23 = arith.constant dense<0.000000e+00> : vector<8xf32>
    %51 = vector.multi_reduction <add>, %50, %cst_23 [1] : vector<8x128xf32> to vector<8xf32>
    %52 = vector.shape_cast %51 : vector<8xf32> to vector<8x1xf32>
    %53 = math.log %52 : vector<8x1xf32>
    %54 = vector.broadcast %53 : vector<8x1xf32> to vector<8x128xf32>
    %55 = arith.subf %49, %54 : vector<8x128xf32>
    %c0_24 = arith.constant 0 : index
    %c0_25 = arith.constant 0 : index
    %56 = vector.load %arg8[%c0_24, %c0_25] : memref<8x128xf32, #tpu.memory_space<vmem>>, vector<8x128xf32>
    tpu.vector_store %arg8[%c0_24, %c0_25], %55 {strides = array<i32>} : memref<8x128xf32, #tpu.memory_space<vmem>>, vector<8x128xf32>,
    return
  }
  func.func @transform_0(%arg0: i32) -> (i32, i32) {
    %c0_i32 = arith.constant 0 : i32
    %c0_i32_0 = arith.constant 0 : i32
    return %arg0, %c0_i32 : i32, i32
  }
  func.func @transform_1(%arg0: i32) -> (i32, i32) {
    %c0_i32 = arith.constant 0 : i32
    %c0_i32_0 = arith.constant 0 : i32
    %c0_i32_1 = arith.constant 0 : i32
    return %c0_i32, %c0_i32_0 : i32, i32
  }
  func.func @transform_2(%arg0: i32) -> (i32, i32) {
    %c0_i32 = arith.constant 0 : i32
    %c0_i32_0 = arith.constant 0 : i32
    %c0_i32_1 = arith.constant 0 : i32
    return %c0_i32, %c0_i32_0 : i32, i32
  }
  func.func @transform_3(%arg0: i32) -> (i32, i32) {
    %c0_i32 = arith.constant 0 : i32
    %c0_i32_0 = arith.constant 0 : i32
    %c0_i32_1 = arith.constant 0 : i32
    return %c0_i32, %c0_i32_0 : i32, i32
  }
  func.func @transform_4(%arg0: i32) -> (i32, i32) {
    %c0_i32 = arith.constant 0 : i32
    %c0_i32_0 = arith.constant 0 : i32
    %c0_i32_1 = arith.constant 0 : i32
    return %c0_i32, %c0_i32_0 : i32, i32
  }
  func.func @transform_5(%arg0: i32) -> (i32, i32) {
    %c0_i32 = arith.constant 0 : i32
    %c0_i32_0 = arith.constant 0 : i32
    %c0_i32_1 = arith.constant 0 : i32
    return %c0_i32, %c0_i32_0 : i32, i32
  }
  func.func @transform_6(%arg0: i32) -> (i32, i32) {
    %c0_i32 = arith.constant 0 : i32
    %c0_i32_0 = arith.constant 0 : i32
    %c0_i32_1 = arith.constant 0 : i32
    return %c0_i32, %c0_i32_0 : i32, i32
  }
  func.func @transform_7(%arg0: i32) -> (i32, i32) {
    %c0_i32 = arith.constant 0 : i32
    %c0_i32_0 = arith.constant 0 : i32
    return %arg0, %c0_i32 : i32, i32
  }
}

</mosaic_0001>

<llo_original>
// kernel: tpu_custom_call.1
$region0: #{tpu_custom_call.1}
  #allocation0 [shape = 'u32[]', space=smem, size = 0x4, offset = 0x4, fixed_abs, tag = 'smem constant byte address 0x4 - core index']
  #allocation1 [shape = 'u32[144,128]{1,0:T(1,128)}', space=vmem, size = 0x12000, scoped, tag = 'internal scratch']
  %s0 = inlined_call_operand.vmem [shape: f32[8,2], index: 0, kind: input, shape index: {}]
  %s1 = inlined_call_operand.vmem [shape: f32[2,128], index: 1, kind: input, shape index: {}]
  %s2 = inlined_call_operand.vmem [shape: f32[1,128], index: 2, kind: input, shape index: {}]
  %s3 = inlined_call_operand.hbm [shape: bf16[128,128], index: 3, kind: input, shape index: {}]
  %s4 = inlined_call_operand.vmem [shape: f32[1,128], index: 4, kind: input, shape index: {}]
  %s5 = inlined_call_operand.hbm [shape: bf16[128,128], index: 5, kind: input, shape index: {}]
  %s6 = inlined_call_operand.vmem [shape: f32[1,128], index: 6, kind: input, shape index: {}]
  %s7 = inlined_call_operand.hbm [shape: f32[8,128], index: 7, kind: output, shape index: {}]
  %s8 = sld [smem:[#allocation0]]
  $region46: #{tpu_custom_call.1} parent=0
    _
  %s10 = ssub.s32 1, %s8
  %s11 = scalar_select 0, %s10, %s8
  $region1: #{tpu_custom_call.1} parent=0
    #allocation2 [shape = 'u8[32768]{0}', space=vmem, size = 0x8000, scoped, tag = 'input window, operand 3, single buffered']
    #allocation3 [shape = 's32[1]{0}', space=sflag, size = 0x4, scoped, tag = 'scoped memory for tpu_custom_call.1']
    #allocation4 [shape = 's32[1]{0}', space=sflag, size = 0x4, scoped, tag = 'scoped memory for tpu_custom_call.1']
    #allocation5 [shape = 'u8[32768]{0}', space=vmem, size = 0x8000, scoped, tag = 'input window, operand 5, single buffered']
    #allocation6 [shape = 's32[1]{0}', space=sflag, size = 0x4, scoped, tag = 'scoped memory for tpu_custom_call.1']
    #allocation7 [shape = 'u8[4096]{0}', space=vmem, size = 0x1000, scoped, tag = 'output window, operand 0, single buffered']
    %12 = vsyncpa [#allocation3], 0
    %13 = vsyncpa [#allocation6], 0
    %14 = vsyncpa [#allocation4], 0
    // Predicated region
    $region2: #{tpu_custom_call.1} parent=1 // pred_check
      _
    $region3: #{tpu_custom_call.1} parent=1 // pred_check_branch
      %16 = sbr.rel (0) target = $region5
    $region4: #{tpu_custom_call.1} parent=1 // pred_region
      _
    $region5: #{tpu_custom_call.1} parent=1 // pred_fallthru
      _
    // Predicated region
    $region6: #{tpu_custom_call.1} parent=1 // pred_check
      _
    $region7: #{tpu_custom_call.1} parent=1 // pred_check_branch
      %18 = sbr.rel (0) target = $region9
    $region8: #{tpu_custom_call.1} parent=1 // pred_region
      _
    $region9: #{tpu_custom_call.1} parent=1 // pred_fallthru
      _
    // Predicated region
    $region10: #{tpu_custom_call.1} parent=1 // pred_check
      _
    $region11: #{tpu_custom_call.1} parent=1 // pred_check_branch
      %20 = sbr.rel (0) target = $region13
    $region12: #{tpu_custom_call.1} parent=1 // pred_region
      _
    $region13: #{tpu_custom_call.1} parent=1 // pred_fallthru
      _
    // Predicated region
    $region14: #{tpu_custom_call.1} parent=1 // pred_check
      _
    $region15: #{tpu_custom_call.1} parent=1 // pred_check_branch
      %22 = sbr.rel (0) target = $region17
    $region16: #{tpu_custom_call.1} parent=1 // pred_region
      %s24 = ssub.s32 1024, 1024
      %25 = vsyncadd [#allocation3], %s24
      %s26 = sshll.u32 [#allocation2], 4
      %s27 = int_to_ptr.vmem [resolvable:$true] %s26
      %32 = dma.hbm_to_vmem [thread:$0]  %s3, 1024, %s27, [#allocation3], 64, 64, 4
    $region17: #{tpu_custom_call.1} parent=1 // pred_fallthru
      _
    // Predicated region
    $region18: #{tpu_custom_call.1} parent=1 // pred_check
      _
    $region19: #{tpu_custom_call.1} parent=1 // pred_check_branch
      %34 = sbr.rel (0) target = $region21
    $region20: #{tpu_custom_call.1} parent=1 // pred_region
      _
    $region21: #{tpu_custom_call.1} parent=1 // pred_fallthru
      _
    // Predicated region
    $region22: #{tpu_custom_call.1} parent=1 // pred_check
      _
    $region23: #{tpu_custom_call.1} parent=1 // pred_check_branch
      %36 = sbr.rel (0) target = $region25
    $region24: #{tpu_custom_call.1} parent=1 // pred_region
      %s38 = ssub.s32 1024, 1024
      %39 = vsyncadd [#allocation6], %s38
      %s40 = sshll.u32 [#allocation5], 4
      %s41 = int_to_ptr.vmem [resolvable:$true] %s40
      %46 = dma.hbm_to_vmem [thread:$0]  %s5, 1024, %s41, [#allocation6], 64, 64, 4
    $region25: #{tpu_custom_call.1} parent=1 // pred_fallthru
      _
    // Predicated region
    $region26: #{tpu_custom_call.1} parent=1 // pred_check
      _
    $region27: #{tpu_custom_call.1} parent=1 // pred_check_branch
      %48 = sbr.rel (0) target = $region29
    $region28: #{tpu_custom_call.1} parent=1 // pred_region
      _
    $region29: #{tpu_custom_call.1} parent=1 // pred_fallthru
      _
    // Predicated region
    $region30: #{tpu_custom_call.1} parent=1 // pred_check
      _
    $region31: #{tpu_custom_call.1} parent=1 // pred_check_branch
      %50 = sbr.rel (0) target = $region33
    $region32: #{tpu_custom_call.1} parent=1 // pred_region
      %51 = dma.done [#allocation3], 1024
    $region33: #{tpu_custom_call.1} parent=1 // pred_fallthru
      _
    // Predicated region
    $region34: #{tpu_custom_call.1} parent=1 // pred_check
      _
    $region35: #{tpu_custom_call.1} parent=1 // pred_check_branch
      %53 = sbr.rel (0) target = $region37
    $region36: #{tpu_custom_call.1} parent=1 // pred_region
      %54 = dma.done [#allocation6], 1024
    $region37: #{tpu_custom_call.1} parent=1 // pred_fallthru
      _
    %v56 = vld [vmem:[%s0] sm:$0xff]
    %v57 = vld [vmem:[%s1] sm:$0x1]
    %59 = vset.pattern.permute.xlu0 0
    %60 = vperm.xlu0 %59, %v56
    %v61 = vpop.permute.xlu0 %60
    %v63 = vlaneseq
    %v64 = vshrl.u32 %v63, 7
    %v65 = vsub.s32 0, %v64
    %v66 = vrot.slane %v57, %v65
    %v67 = vmul.f32 %v61, %v66
    %v68 = vld [vmem:[%s1 + $0x1] sm:$0x1]
    %69 = vset.pattern.permute.xlu0 1
    %70 = vperm.xlu0 %69, %v56
    %v71 = vpop.permute.xlu0 %70
    %v73 = vlaneseq
    %v74 = vshrl.u32 %v73, 7
    %v75 = vsub.s32 0, %v74
    %v76 = vrot.slane %v68, %v75
    %v77 = vmul.f32 %v71, %v76
    %v78 = vadd.f32 %v67, %v77
    %v79 = vld [vmem:[%s2] sm:$0x1]
    %v81 = vlaneseq
    %v82 = vshrl.u32 %v81, 7
    %v83 = vsub.s32 0, %v82
    %v84 = vrot.slane %v79, %v83
    %v86 = vadd.f32 %v78, %v84
    %v87 = vmul.f32 %v86, 0.5
    %v88 = vtanh.pop %v87
    %v89 = vadd.f32 %v88, 1.0
    %v90 = vmul.f32 %v89, 0.5
    %v91 = vpack.c.bf16 %v90, %v90
    %v92 = vld [vmem:[#allocation2] sm:$0xf]
    %v93 = vld [vmem:[#allocation2 + $0x4] sm:$0xf]
    %v94 = vld [vmem:[#allocation2 + $0x8] sm:$0xf]
    %v95 = vld [vmem:[#allocation2 + $0xc] sm:$0xf]
    %v96 = vld [vmem:[#allocation2 + $0x10] sm:$0xf]
    %v97 = vld [vmem:[#allocation2 + $0x14] sm:$0xf]
    %v98 = vld [vmem:[#allocation2 + $0x18] sm:$0xf]
    %v99 = vld [vmem:[#allocation2 + $0x1c] sm:$0xf]
    %v100 = vld [vmem:[#allocation2 + $0x20] sm:$0xf]
    %v101 = vld [vmem:[#allocation2 + $0x24] sm:$0xf]
    %v102 = vld [vmem:[#allocation2 + $0x28] sm:$0xf]
    %v103 = vld [vmem:[#allocation2 + $0x2c] sm:$0xf]
    %v104 = vld [vmem:[#allocation2 + $0x30] sm:$0xf]
    %v105 = vld [vmem:[#allocation2 + $0x34] sm:$0xf]
    %v106 = vld [vmem:[#allocation2 + $0x38] sm:$0xf]
    %v107 = vld [vmem:[#allocation2 + $0x3c] sm:$0xf]
    %v108 = vld [vmem:[%s4] sm:$0x1]
    %v110 = vlaneseq
    %v111 = vshrl.u32 %v110, 7
    %v112 = vsub.s32 0, %v111
    %v113 = vrot.slane %v108, %v112
    %v131 = vunpack.c.l.b16 %v92
    %v132 = vunpack.c.l.b16 %v93
    %v133 = vunpack.c.l.b16 %v94
    %v134 = vunpack.c.l.b16 %v95
    %v135 = vunpack.c.l.b16 %v96
    %v136 = vunpack.c.l.b16 %v97
    %v137 = vunpack.c.l.b16 %v98
    %v138 = vunpack.c.l.b16 %v99
    %v139 = vunpack.c.l.b16 %v100
    %v140 = vunpack.c.l.b16 %v101
    %v141 = vunpack.c.l.b16 %v102
    %v142 = vunpack.c.l.b16 %v103
    %v143 = vunpack.c.l.b16 %v104
    %v144 = vunpack.c.l.b16 %v105
    %v145 = vunpack.c.l.b16 %v106
    %v146 = vunpack.c.l.b16 %v107
    %v147 = vpack.c.b16 %v132, %v131
    %v148 = vpack.c.b16 %v134, %v133
    %v149 = vpack.c.b16 %v136, %v135
    %v150 = vpack.c.b16 %v138, %v137
    %v151 = vpack.c.b16 %v140, %v139
    %v152 = vpack.c.b16 %v142, %v141
    %v153 = vpack.c.b16 %v144, %v143
    %v154 = vpack.c.b16 %v146, %v145
    %163 = vmatprep.subr.bf16.mxu0 0
    %164 = vmatpush1.bf16.msra.mxu0 %v147
    %165 = vmatprep.subr.bf16.mxu0 0
    %166 = vmatpush1.bf16.msra.mxu0 %v148
    %167 = vmatprep.subr.bf16.mxu0 0
    %168 = vmatpush1.bf16.msra.mxu0 %v149
    %169 = vmatprep.subr.bf16.mxu0 0
    %170 = vmatpush1.bf16.msra.mxu0 %v150
    %171 = vmatprep.subr.bf16.mxu0 0
    %172 = vmatpush1.bf16.msra.mxu0 %v151
    %173 = vmatprep.subr.bf16.mxu0 0
    %174 = vmatpush1.bf16.msra.mxu0 %v152
    %175 = vmatprep.subr.bf16.mxu0 0
    %176 = vmatpush1.bf16.msra.mxu0 %v153
    %177 = vmatprep.subr.bf16.mxu0 0
    %178 = vmatpush1.bf16.msra.mxu0 %v154
    %179 = vmatprep.subr.bf16.mxu0 0
    %180 = vmatpush1.bf16.msra.mxu0 0
    %181 = vmatprep.subr.bf16.mxu0 0
    %182 = vmatpush1.bf16.msra.mxu0 0
    %183 = vmatprep.subr.bf16.mxu0 0
    %184 = vmatpush1.bf16.msra.mxu0 0
    %185 = vmatprep.subr.bf16.mxu0 0
    %186 = vmatpush1.bf16.msra.mxu0 0
    %187 = vmatprep.subr.bf16.mxu0 0
    %188 = vmatpush1.bf16.msra.mxu0 0
    %189 = vmatprep.subr.bf16.mxu0 0
    %190 = vmatpush1.bf16.msra.mxu0 0
    %191 = vmatprep.subr.bf16.mxu0 0
    %192 = vmatpush1.bf16.msra.mxu0 0
    %193 = vmatprep.subr.bf16.mxu0 0
    %194 = vmatpush1.bf16.msra.mxu0 0
    %195 = vmatprep.mubr.bf16.mxu0 0
    %196 = vmatmul.mubr.bf16.gmra.mrb[0].mxu0 %v91
    %v197 = vpop.f32.mrb[0].mxu0
    %v198 = vadd.f32 %v113, %v197
    %v199 = vpop.f32.mrb[0].mxu0
    %v200 = vpop.f32.mrb[0].mxu0
    %v201 = vpop.f32.mrb[0].mxu0
    %202 = vdwg.mxu0
    %v203 = vmul.f32 %v198, 0.5
    %v204 = vtanh.pop %v203
    %v205 = vadd.f32 %v204, 1.0
    %v206 = vmul.f32 %v205, 0.5
    %v207 = vpack.c.bf16 %v206, %v206
    %v208 = vld [vmem:[#allocation5] sm:$0xf]
    %v209 = vld [vmem:[#allocation5 + $0x4] sm:$0xf]
    %v210 = vld [vmem:[#allocation5 + $0x8] sm:$0xf]
    %v211 = vld [vmem:[#allocation5 + $0xc] sm:$0xf]
    %v212 = vld [vmem:[#allocation5 + $0x10] sm:$0xf]
    %v213 = vld [vmem:[#allocation5 + $0x14] sm:$0xf]
    %v214 = vld [vmem:[#allocation5 + $0x18] sm:$0xf]
    %v215 = vld [vmem:[#allocation5 + $0x1c] sm:$0xf]
    %v216 = vld [vmem:[#allocation5 + $0x20] sm:$0xf]
    %v217 = vld [vmem:[#allocation5 + $0x24] sm:$0xf]
    %v218 = vld [vmem:[#allocation5 + $0x28] sm:$0xf]
    %v219 = vld [vmem:[#allocation5 + $0x2c] sm:$0xf]
    %v220 = vld [vmem:[#allocation5 + $0x30] sm:$0xf]
    %v221 = vld [vmem:[#allocation5 + $0x34] sm:$0xf]
    %v222 = vld [vmem:[#allocation5 + $0x38] sm:$0xf]
    %v223 = vld [vmem:[#allocation5 + $0x3c] sm:$0xf]
    %v224 = vld [vmem:[%s6] sm:$0x1]
    %v226 = vlaneseq
    %v227 = vshrl.u32 %v226, 7
    %v228 = vsub.s32 0, %v227
    %v229 = vrot.slane %v224, %v228
    %v247 = vunpack.c.l.b16 %v208
    %v248 = vunpack.c.l.b16 %v209
    %v249 = vunpack.c.l.b16 %v210
    %v250 = vunpack.c.l.b16 %v211
    %v251 = vunpack.c.l.b16 %v212
    %v252 = vunpack.c.l.b16 %v213
    %v253 = vunpack.c.l.b16 %v214
    %v254 = vunpack.c.l.b16 %v215
    %v255 = vunpack.c.l.b16 %v216
    %v256 = vunpack.c.l.b16 %v217
    %v257 = vunpack.c.l.b16 %v218
    %v258 = vunpack.c.l.b16 %v219
    %v259 = vunpack.c.l.b16 %v220
    %v260 = vunpack.c.l.b16 %v221
    %v261 = vunpack.c.l.b16 %v222
    %v262 = vunpack.c.l.b16 %v223
    %v263 = vpack.c.b16 %v248, %v247
    %v264 = vpack.c.b16 %v250, %v249
    %v265 = vpack.c.b16 %v252, %v251
    %v266 = vpack.c.b16 %v254, %v253
    %v267 = vpack.c.b16 %v256, %v255
    %v268 = vpack.c.b16 %v258, %v257
    %v269 = vpack.c.b16 %v260, %v259
    %v270 = vpack.c.b16 %v262, %v261
    %279 = vmatprep.subr.bf16.mxu0 0
    %280 = vmatpush1.bf16.msra.mxu0 %v263
    %281 = vmatprep.subr.bf16.mxu0 0
    %282 = vmatpush1.bf16.msra.mxu0 %v264
    %283 = vmatprep.subr.bf16.mxu0 0
    %284 = vmatpush1.bf16.msra.mxu0 %v265
    %285 = vmatprep.subr.bf16.mxu0 0
    %286 = vmatpush1.bf16.msra.mxu0 %v266
    %287 = vmatprep.subr.bf16.mxu0 0
    %288 = vmatpush1.bf16.msra.mxu0 %v267
    %289 = vmatprep.subr.bf16.mxu0 0
    %290 = vmatpush1.bf16.msra.mxu0 %v268
    %291 = vmatprep.subr.bf16.mxu0 0
    %292 = vmatpush1.bf16.msra.mxu0 %v269
    %293 = vmatprep.subr.bf16.mxu0 0
    %294 = vmatpush1.bf16.msra.mxu0 %v270
    %295 = vmatprep.subr.bf16.mxu0 0
    %296 = vmatpush1.bf16.msra.mxu0 0
    %297 = vmatprep.subr.bf16.mxu0 0
    %298 = vmatpush1.bf16.msra.mxu0 0
    %299 = vmatprep.subr.bf16.mxu0 0
    %300 = vmatpush1.bf16.msra.mxu0 0
    %301 = vmatprep.subr.bf16.mxu0 0
    %302 = vmatpush1.bf16.msra.mxu0 0
    %303 = vmatprep.subr.bf16.mxu0 0
    %304 = vmatpush1.bf16.msra.mxu0 0
    %305 = vmatprep.subr.bf16.mxu0 0
    %306 = vmatpush1.bf16.msra.mxu0 0
    %307 = vmatprep.subr.bf16.mxu0 0
    %308 = vmatpush1.bf16.msra.mxu0 0
    %309 = vmatprep.subr.bf16.mxu0 0
    %310 = vmatpush1.bf16.msra.mxu0 0
    %311 = vmatprep.mubr.bf16.mxu0 0
    %312 = vmatmul.mubr.bf16.gmra.mrb[0].mxu0 %v207
    %v313 = vpop.f32.mrb[0].mxu0
    %v314 = vadd.f32 %v229, %v313
    %v315 = vpop.f32.mrb[0].mxu0
    %v316 = vpop.f32.mrb[0].mxu0
    %v317 = vpop.f32.mrb[0].mxu0
    %318 = vdwg.mxu0
    %v319 = vlaneseq
    %v320 = vand.u32 %v319, 127
    %vm321 = vcmp.lt.s32.totalorder %v320, 5
    %v322 = vsel %vm321, %v314, -1e+30
    %323 = vmax.xlane.f32.xlu0 %v322
    %v324 = vpop.xlane.xlu0 %323
    %v325 = vsub.f32 %v322, %v324
    %v326 = vmul.f32 %v325, 1.442695
    %v327 = vpow.pop %v326
    %328 = vadd.xlane.f32.xlu0 %v327
    %v329 = vpop.xlane.xlu0 %328
    %v330 = vlog2.pop %v329
    %v331 = vmul.f32 %v330, 0.6931472
    %v332 = vsub.f32 %v325, %v331
    %333 = vst [vmem:[#allocation7] sm:$0xff] %v332
    // Predicated region
    $region38: #{tpu_custom_call.1} parent=1 // pred_check
      _
    $region39: #{tpu_custom_call.1} parent=1 // pred_check_branch
      %335 = sbr.rel (0) target = $region41
    $region40: #{tpu_custom_call.1} parent=1 // pred_region
      %s337 = ssub.s32 128, 128
      %338 = vsyncadd [#allocation4], %s337
      %s340 = sshll.u32 [#allocation7], 4
      %s341 = int_to_ptr.vmem [resolvable:$true] %s340
      %343 = dma.vmem_to_hbm [thread:$0]  %s341, 128, %s7, [#allocation4]
    $region41: #{tpu_custom_call.1} parent=1 // pred_fallthru
      _
    // Predicated region
    $region42: #{tpu_custom_call.1} parent=1 // pred_check
      _
    $region43: #{tpu_custom_call.1} parent=1 // pred_check_branch
      %345 = sbr.rel (0) target = $region45
    $region44: #{tpu_custom_call.1} parent=1 // pred_region
      %346 = dma.done [#allocation4], 128
    $region45: #{tpu_custom_call.1} parent=1 // pred_fallthru
      _
    %347 = vsyncpa [#allocation3], 1
    %348 = vsyncpa [#allocation6], 1
    %349 = vsyncpa [#allocation4], 1

</llo_original>
